<compile_context>
chip_gen: v7x
topology: tpu7x:2x2x1
jax: 0.10.0
libtpu: 0.0.40
codegen_flags: <defaults>
</compile_context>

<pallas_src>
import jax
import jax.numpy as jnp
from jax.experimental import pallas as pl
from jax.experimental.pallas import tpu as pltpu

_HIDDEN = 10
_LANES = 128      # lane width of a vreg
_SUBLANES = 8     # sublane granularity


def _sigmoid(t):
    # One transcendental per element (tanh on the EUP) instead of exp + recip.
    return 0.5 * (jnp.tanh(0.5 * t) + 1.0)


def _mlp_kernel(w1_ref, b1_ref, w2_ref, b2_ref, x_ref, o_ref):
    # x_ref / o_ref : [tile_rows, 128] f32, batch laid out lane-dense.
    # w1_ref, b1_ref, w2_ref : [10] f32 in SMEM;  b2_ref : [1] f32 in SMEM.
    x = x_ref[...]
    acc = jnp.zeros_like(x)
    # Static unroll over the 10 hidden units: pure VPU FMAs + one tanh each.
    for j in range(_HIDDEN):
        h = _sigmoid(x * w1_ref[j] + b1_ref[j])
        acc = acc + h * w2_ref[j]
    o_ref[...] = _sigmoid(acc + b2_ref[0])


def _round_up(n, m):
    return ((n + m - 1) // m) * m


def mlp_forward(x, w1, b1, w2, b2, *, tile_rows=512):
    """x: [B, 1] f32. w1: [1,10], b1: [10]/[1,10], w2: [10,1], b2: [1]/[1,1].

    Returns z: [B, 1] f32 == sigmoid(sigmoid(x @ w1 + b1) @ w2 + b2).
    """
    B = x.shape[0]
    xf = x.reshape(-1).astype(jnp.float32)

    # Lane-dense slab: batch -> [rows, 128]; rows padded to a multiple of the
    # row-tile size (itself a multiple of 8 sublanes).
    rows = max(pl.cdiv(B, _LANES), 1)
    tr = tile_rows if rows >= tile_rows else _round_up(rows, _SUBLANES)
    rows_p = _round_up(rows, tr)
    b_pad = rows_p * _LANES
    if b_pad != B:
        xf = jnp.pad(xf, (0, b_pad - B))
    x2 = xf.reshape(rows_p, _LANES)

    # Scalar weights live in SMEM (32-bit words), resident across all tiles.
    w1f = w1.reshape(-1).astype(jnp.float32)    # [10]
    b1f = b1.reshape(-1).astype(jnp.float32)    # [10]
    w2f = w2.reshape(-1).astype(jnp.float32)    # [10]
    b2f = b2.reshape(-1).astype(jnp.float32)    # [1]

    num_tiles = rows_p // tr
    # Per-tile VMEM: 2 (in+out) * 2 (double buffer) * tr*128*4B  <= ~1 MiB at
    # tr=512 -- comfortably under v7x's 64 MiB / 32 MiB scoped default.
    out = pl.pallas_call(
        _mlp_kernel,
        out_shape=jax.ShapeDtypeStruct((rows_p, _LANES), jnp.float32),
        grid=(num_tiles,),
        in_specs=[
            pl.BlockSpec(memory_space=pltpu.SMEM),        # w1 (whole array)
            pl.BlockSpec(memory_space=pltpu.SMEM),        # b1
            pl.BlockSpec(memory_space=pltpu.SMEM),        # w2
            pl.BlockSpec(memory_space=pltpu.SMEM),        # b2
            pl.BlockSpec((tr, _LANES), lambda i: (i, 0)),  # x row tiles
        ],
        out_specs=pl.BlockSpec((tr, _LANES), lambda i: (i, 0)),
        compiler_params=pltpu.CompilerParams(
            dimension_semantics=("parallel",)),
        cost_estimate=pl.CostEstimate(
            flops=80 * b_pad,
            transcendentals=11 * b_pad,
            bytes_accessed=8 * b_pad + 4 * (3 * _HIDDEN + 1)),
    )(w1f, b1f, w2f, b2f, x2)

    return out.reshape(-1)[:B].reshape(B, 1)


def init_params(key):
    """Mirror nn.Linear(1,10)/nn.Linear(10,1) default init (weights stored
    transposed, [in, out], for right-multiplication)."""
    k1, k2, k3, k4 = jax.random.split(key, 4)
    bound1 = 1.0 / jnp.sqrt(1.0)    # fan_in = 1
    bound2 = 1.0 / jnp.sqrt(10.0)   # fan_in = 10
    w1 = jax.random.uniform(k1, (1, 10), jnp.float32, -bound1, bound1)
    b1 = jax.random.uniform(k2, (1, 10), jnp.float32, -bound1, bound1)
    w2 = jax.random.uniform(k3, (10, 1), jnp.float32, -bound2, bound2)
    b2 = jax.random.uniform(k4, (1, 1), jnp.float32, -bound2, bound2)
    return w1, b1, w2, b2


def reference_forward(x, w1, b1, w2, b2):
    y = jax.nn.sigmoid(x @ w1 + b1)
    z = jax.nn.sigmoid(y @ w2 + b2)
    return z


if __name__ == "__main__":
    key = jax.random.PRNGKey(0)
    k_x, k_x2, k_p = jax.random.split(key, 3)
    w1, b1, w2, b2 = init_params(k_p)

    # Small, module-consistent shape.
    B = 8
    x = jax.random.normal(k_x, (B, 1), jnp.float32)
    z = jax.block_until_ready(mlp_forward(x, w1, b1, w2, b2))
    z_ref = reference_forward(x, w1, b1, w2, b2)
    assert z.shape == (B, 1)
    assert jnp.allclose(z, z_ref, atol=1e-5, rtol=1e-5), "mismatch (B=8)"

    # Exercise the multi-tile grid + batch-padding path.
    B2 = 70_000  # not a multiple of 128; spans 2 row tiles at tr=512
    x2 = jax.random.normal(k_x2, (B2, 1), jnp.float32)
    z2 = jax.block_until_ready(mlp_forward(x2, w1, b1, w2, b2))
    z2_ref = reference_forward(x2, w1, b1, w2, b2)
    assert z2.shape == (B2, 1)
    assert jnp.allclose(z2, z2_ref, atol=1e-5, rtol=1e-5), "mismatch (B=70000)"

    print("KERNEL_OK")
</pallas_src>

<mosaic_0001>
module attributes {stable_mosaic.version = 11 : i64} {
  func.func @_mlp_kernel(%arg0: i32, %arg1: memref<10xf32, #tpu.memory_space<smem>>, %arg2: memref<10xf32, #tpu.memory_space<smem>>, %arg3: memref<10xf32, #tpu.memory_space<smem>>, %arg4: memref<1xf32, #tpu.memory_space<smem>>, %arg5: memref<8x128xf32, #tpu.memory_space<vmem>>, %arg6: memref<8x128xf32, #tpu.memory_space<vmem>>) attributes {dimension_semantics = [#tpu.dimension_semantics<parallel>], iteration_bounds = array<i64: 1>, scalar_prefetch = 0 : i64, scratch_operands = 0 : i64, tpu.core_type = #tpu.core_type<tc>, window_params = [{transform_indices = @transform_0, window_bounds = array<i64: 10>}, {transform_indices = @transform_1, window_bounds = array<i64: 10>}, {transform_indices = @transform_2, window_bounds = array<i64: 10>}, {transform_indices = @transform_3, window_bounds = array<i64: 1>}, {transform_indices = @transform_4, window_bounds = array<i64: 8, 128>}, {transform_indices = @transform_5, window_bounds = array<i64: 8, 128>}]} {
    %c0 = arith.constant 0 : index
    %c0_0 = arith.constant 0 : index
    %0 = vector.load %arg5[%c0, %c0_0] : memref<8x128xf32, #tpu.memory_space<vmem>>, vector<8x128xf32>
    %cst = arith.constant 0.000000e+00 : f32
    %1 = vector.broadcast %cst : f32 to vector<8x128xf32>
    %c0_1 = arith.constant 0 : index
    %2 = memref.load %arg1[%c0_1] : memref<10xf32, #tpu.memory_space<smem>>
    %3 = vector.broadcast %2 : f32 to vector<8x128xf32>
    %4 = arith.mulf %0, %3 : vector<8x128xf32>
    %c0_2 = arith.constant 0 : index
    %5 = memref.load %arg2[%c0_2] : memref<10xf32, #tpu.memory_space<smem>>
    %6 = vector.broadcast %5 : f32 to vector<8x128xf32>
    %7 = arith.addf %4, %6 : vector<8x128xf32>
    %cst_3 = arith.constant 5.000000e-01 : f32
    %8 = vector.broadcast %cst_3 : f32 to vector<8x128xf32>
    %9 = arith.mulf %8, %7 : vector<8x128xf32>
    %10 = math.tanh %9 : vector<8x128xf32>
    %cst_4 = arith.constant 1.000000e+00 : f32
    %11 = vector.broadcast %cst_4 : f32 to vector<8x128xf32>
    %12 = arith.addf %10, %11 : vector<8x128xf32>
    %cst_5 = arith.constant 5.000000e-01 : f32
    %13 = vector.broadcast %cst_5 : f32 to vector<8x128xf32>
    %14 = arith.mulf %13, %12 : vector<8x128xf32>
    %c0_6 = arith.constant 0 : index
    %15 = memref.load %arg3[%c0_6] : memref<10xf32, #tpu.memory_space<smem>>
    %16 = vector.broadcast %15 : f32 to vector<8x128xf32>
    %17 = arith.mulf %14, %16 : vector<8x128xf32>
    %18 = arith.addf %1, %17 : vector<8x128xf32>
    %c1 = arith.constant 1 : index
    %19 = memref.load %arg1[%c1] : memref<10xf32, #tpu.memory_space<smem>>
    %20 = vector.broadcast %19 : f32 to vector<8x128xf32>
    %21 = arith.mulf %0, %20 : vector<8x128xf32>
    %c1_7 = arith.constant 1 : index
    %22 = memref.load %arg2[%c1_7] : memref<10xf32, #tpu.memory_space<smem>>
    %23 = vector.broadcast %22 : f32 to vector<8x128xf32>
    %24 = arith.addf %21, %23 : vector<8x128xf32>
    %cst_8 = arith.constant 5.000000e-01 : f32
    %25 = vector.broadcast %cst_8 : f32 to vector<8x128xf32>
    %26 = arith.mulf %25, %24 : vector<8x128xf32>
    %27 = math.tanh %26 : vector<8x128xf32>
    %cst_9 = arith.constant 1.000000e+00 : f32
    %28 = vector.broadcast %cst_9 : f32 to vector<8x128xf32>
    %29 = arith.addf %27, %28 : vector<8x128xf32>
    %cst_10 = arith.constant 5.000000e-01 : f32
    %30 = vector.broadcast %cst_10 : f32 to vector<8x128xf32>
    %31 = arith.mulf %30, %29 : vector<8x128xf32>
    %c1_11 = arith.constant 1 : index
    %32 = memref.load %arg3[%c1_11] : memref<10xf32, #tpu.memory_space<smem>>
    %33 = vector.broadcast %32 : f32 to vector<8x128xf32>
    %34 = arith.mulf %31, %33 : vector<8x128xf32>
    %35 = arith.addf %18, %34 : vector<8x128xf32>
    %c2 = arith.constant 2 : index
    %36 = memref.load %arg1[%c2] : memref<10xf32, #tpu.memory_space<smem>>
    %37 = vector.broadcast %36 : f32 to vector<8x128xf32>
    %38 = arith.mulf %0, %37 : vector<8x128xf32>
    %c2_12 = arith.constant 2 : index
    %39 = memref.load %arg2[%c2_12] : memref<10xf32, #tpu.memory_space<smem>>
    %40 = vector.broadcast %39 : f32 to vector<8x128xf32>
    %41 = arith.addf %38, %40 : vector<8x128xf32>
    %cst_13 = arith.constant 5.000000e-01 : f32
    %42 = vector.broadcast %cst_13 : f32 to vector<8x128xf32>
    %43 = arith.mulf %42, %41 : vector<8x128xf32>
    %44 = math.tanh %43 : vector<8x128xf32>
    %cst_14 = arith.constant 1.000000e+00 : f32
    %45 = vector.broadcast %cst_14 : f32 to vector<8x128xf32>
    %46 = arith.addf %44, %45 : vector<8x128xf32>
    %cst_15 = arith.constant 5.000000e-01 : f32
    %47 = vector.broadcast %cst_15 : f32 to vector<8x128xf32>
    %48 = arith.mulf %47, %46 : vector<8x128xf32>
    %c2_16 = arith.constant 2 : index
    %49 = memref.load %arg3[%c2_16] : memref<10xf32, #tpu.memory_space<smem>>
    %50 = vector.broadcast %49 : f32 to vector<8x128xf32>
    %51 = arith.mulf %48, %50 : vector<8x128xf32>
    %52 = arith.addf %35, %51 : vector<8x128xf32>
    %c3 = arith.constant 3 : index
    %53 = memref.load %arg1[%c3] : memref<10xf32, #tpu.memory_space<smem>>
    %54 = vector.broadcast %53 : f32 to vector<8x128xf32>
    %55 = arith.mulf %0, %54 : vector<8x128xf32>
    %c3_17 = arith.constant 3 : index
    %56 = memref.load %arg2[%c3_17] : memref<10xf32, #tpu.memory_space<smem>>
    %57 = vector.broadcast %56 : f32 to vector<8x128xf32>
    %58 = arith.addf %55, %57 : vector<8x128xf32>
    %cst_18 = arith.constant 5.000000e-01 : f32
    %59 = vector.broadcast %cst_18 : f32 to vector<8x128xf32>
    %60 = arith.mulf %59, %58 : vector<8x128xf32>
    %61 = math.tanh %60 : vector<8x128xf32>
    %cst_19 = arith.constant 1.000000e+00 : f32
    %62 = vector.broadcast %cst_19 : f32 to vector<8x128xf32>
    %63 = arith.addf %61, %62 : vector<8x128xf32>
    %cst_20 = arith.constant 5.000000e-01 : f32
    %64 = vector.broadcast %cst_20 : f32 to vector<8x128xf32>
    %65 = arith.mulf %64, %63 : vector<8x128xf32>
    %c3_21 = arith.constant 3 : index
    %66 = memref.load %arg3[%c3_21] : memref<10xf32, #tpu.memory_space<smem>>
    %67 = vector.broadcast %66 : f32 to vector<8x128xf32>
    %68 = arith.mulf %65, %67 : vector<8x128xf32>
    %69 = arith.addf %52, %68 : vector<8x128xf32>
    %c4 = arith.constant 4 : index
    %70 = memref.load %arg1[%c4] : memref<10xf32, #tpu.memory_space<smem>>
    %71 = vector.broadcast %70 : f32 to vector<8x128xf32>
    %72 = arith.mulf %0, %71 : vector<8x128xf32>
    %c4_22 = arith.constant 4 : index
    %73 = memref.load %arg2[%c4_22] : memref<10xf32, #tpu.memory_space<smem>>
    %74 = vector.broadcast %73 : f32 to vector<8x128xf32>
    %75 = arith.addf %72, %74 : vector<8x128xf32>
    %cst_23 = arith.constant 5.000000e-01 : f32
    %76 = vector.broadcast %cst_23 : f32 to vector<8x128xf32>
    %77 = arith.mulf %76, %75 : vector<8x128xf32>
    %78 = math.tanh %77 : vector<8x128xf32>
    %cst_24 = arith.constant 1.000000e+00 : f32
    %79 = vector.broadcast %cst_24 : f32 to vector<8x128xf32>
    %80 = arith.addf %78, %79 : vector<8x128xf32>
    %cst_25 = arith.constant 5.000000e-01 : f32
    %81 = vector.broadcast %cst_25 : f32 to vector<8x128xf32>
    %82 = arith.mulf %81, %80 : vector<8x128xf32>
    %c4_26 = arith.constant 4 : index
    %83 = memref.load %arg3[%c4_26] : memref<10xf32, #tpu.memory_space<smem>>
    %84 = vector.broadcast %83 : f32 to vector<8x128xf32>
    %85 = arith.mulf %82, %84 : vector<8x128xf32>
    %86 = arith.addf %69, %85 : vector<8x128xf32>
    %c5 = arith.constant 5 : index
    %87 = memref.load %arg1[%c5] : memref<10xf32, #tpu.memory_space<smem>>
    %88 = vector.broadcast %87 : f32 to vector<8x128xf32>
    %89 = arith.mulf %0, %88 : vector<8x128xf32>
    %c5_27 = arith.constant 5 : index
    %90 = memref.load %arg2[%c5_27] : memref<10xf32, #tpu.memory_space<smem>>
    %91 = vector.broadcast %90 : f32 to vector<8x128xf32>
    %92 = arith.addf %89, %91 : vector<8x128xf32>
    %cst_28 = arith.constant 5.000000e-01 : f32
    %93 = vector.broadcast %cst_28 : f32 to vector<8x128xf32>
    %94 = arith.mulf %93, %92 : vector<8x128xf32>
    %95 = math.tanh %94 : vector<8x128xf32>
    %cst_29 = arith.constant 1.000000e+00 : f32
    %96 = vector.broadcast %cst_29 : f32 to vector<8x128xf32>
    %97 = arith.addf %95, %96 : vector<8x128xf32>
    %cst_30 = arith.constant 5.000000e-01 : f32
    %98 = vector.broadcast %cst_30 : f32 to vector<8x128xf32>
    %99 = arith.mulf %98, %97 : vector<8x128xf32>
    %c5_31 = arith.constant 5 : index
    %100 = memref.load %arg3[%c5_31] : memref<10xf32, #tpu.memory_space<smem>>
    %101 = vector.broadcast %100 : f32 to vector<8x128xf32>
    %102 = arith.mulf %99, %101 : vector<8x128xf32>
    %103 = arith.addf %86, %102 : vector<8x128xf32>
    %c6 = arith.constant 6 : index
    %104 = memref.load %arg1[%c6] : memref<10xf32, #tpu.memory_space<smem>>
    %105 = vector.broadcast %104 : f32 to vector<8x128xf32>
    %106 = arith.mulf %0, %105 : vector<8x128xf32>
    %c6_32 = arith.constant 6 : index
    %107 = memref.load %arg2[%c6_32] : memref<10xf32, #tpu.memory_space<smem>>
    %108 = vector.broadcast %107 : f32 to vector<8x128xf32>
    %109 = arith.addf %106, %108 : vector<8x128xf32>
    %cst_33 = arith.constant 5.000000e-01 : f32
    %110 = vector.broadcast %cst_33 : f32 to vector<8x128xf32>
    %111 = arith.mulf %110, %109 : vector<8x128xf32>
    %112 = math.tanh %111 : vector<8x128xf32>
    %cst_34 = arith.constant 1.000000e+00 : f32
    %113 = vector.broadcast %cst_34 : f32 to vector<8x128xf32>
    %114 = arith.addf %112, %113 : vector<8x128xf32>
    %cst_35 = arith.constant 5.000000e-01 : f32
    %115 = vector.broadcast %cst_35 : f32 to vector<8x128xf32>
    %116 = arith.mulf %115, %114 : vector<8x128xf32>
    %c6_36 = arith.constant 6 : index
    %117 = memref.load %arg3[%c6_36] : memref<10xf32, #tpu.memory_space<smem>>
    %118 = vector.broadcast %117 : f32 to vector<8x128xf32>
    %119 = arith.mulf %116, %118 : vector<8x128xf32>
    %120 = arith.addf %103, %119 : vector<8x128xf32>
    %c7 = arith.constant 7 : index
    %121 = memref.load %arg1[%c7] : memref<10xf32, #tpu.memory_space<smem>>
    %122 = vector.broadcast %121 : f32 to vector<8x128xf32>
    %123 = arith.mulf %0, %122 : vector<8x128xf32>
    %c7_37 = arith.constant 7 : index
    %124 = memref.load %arg2[%c7_37] : memref<10xf32, #tpu.memory_space<smem>>
    %125 = vector.broadcast %124 : f32 to vector<8x128xf32>
    %126 = arith.addf %123, %125 : vector<8x128xf32>
    %cst_38 = arith.constant 5.000000e-01 : f32
    %127 = vector.broadcast %cst_38 : f32 to vector<8x128xf32>
    %128 = arith.mulf %127, %126 : vector<8x128xf32>
    %129 = math.tanh %128 : vector<8x128xf32>
    %cst_39 = arith.constant 1.000000e+00 : f32
    %130 = vector.broadcast %cst_39 : f32 to vector<8x128xf32>
    %131 = arith.addf %129, %130 : vector<8x128xf32>
    %cst_40 = arith.constant 5.000000e-01 : f32
    %132 = vector.broadcast %cst_40 : f32 to vector<8x128xf32>
    %133 = arith.mulf %132, %131 : vector<8x128xf32>
    %c7_41 = arith.constant 7 : index
    %134 = memref.load %arg3[%c7_41] : memref<10xf32, #tpu.memory_space<smem>>
    %135 = vector.broadcast %134 : f32 to vector<8x128xf32>
    %136 = arith.mulf %133, %135 : vector<8x128xf32>
    %137 = arith.addf %120, %136 : vector<8x128xf32>
    %c8 = arith.constant 8 : index
    %138 = memref.load %arg1[%c8] : memref<10xf32, #tpu.memory_space<smem>>
    %139 = vector.broadcast %138 : f32 to vector<8x128xf32>
    %140 = arith.mulf %0, %139 : vector<8x128xf32>
    %c8_42 = arith.constant 8 : index
    %141 = memref.load %arg2[%c8_42] : memref<10xf32, #tpu.memory_space<smem>>
    %142 = vector.broadcast %141 : f32 to vector<8x128xf32>
    %143 = arith.addf %140, %142 : vector<8x128xf32>
    %cst_43 = arith.constant 5.000000e-01 : f32
    %144 = vector.broadcast %cst_43 : f32 to vector<8x128xf32>
    %145 = arith.mulf %144, %143 : vector<8x128xf32>
    %146 = math.tanh %145 : vector<8x128xf32>
    %cst_44 = arith.constant 1.000000e+00 : f32
    %147 = vector.broadcast %cst_44 : f32 to vector<8x128xf32>
    %148 = arith.addf %146, %147 : vector<8x128xf32>
    %cst_45 = arith.constant 5.000000e-01 : f32
    %149 = vector.broadcast %cst_45 : f32 to vector<8x128xf32>
    %150 = arith.mulf %149, %148 : vector<8x128xf32>
    %c8_46 = arith.constant 8 : index
    %151 = memref.load %arg3[%c8_46] : memref<10xf32, #tpu.memory_space<smem>>
    %152 = vector.broadcast %151 : f32 to vector<8x128xf32>
    %153 = arith.mulf %150, %152 : vector<8x128xf32>
    %154 = arith.addf %137, %153 : vector<8x128xf32>
    %c9 = arith.constant 9 : index
    %155 = memref.load %arg1[%c9] : memref<10xf32, #tpu.memory_space<smem>>
    %156 = vector.broadcast %155 : f32 to vector<8x128xf32>
    %157 = arith.mulf %0, %156 : vector<8x128xf32>
    %c9_47 = arith.constant 9 : index
    %158 = memref.load %arg2[%c9_47] : memref<10xf32, #tpu.memory_space<smem>>
    %159 = vector.broadcast %158 : f32 to vector<8x128xf32>
    %160 = arith.addf %157, %159 : vector<8x128xf32>
    %cst_48 = arith.constant 5.000000e-01 : f32
    %161 = vector.broadcast %cst_48 : f32 to vector<8x128xf32>
    %162 = arith.mulf %161, %160 : vector<8x128xf32>
    %163 = math.tanh %162 : vector<8x128xf32>
    %cst_49 = arith.constant 1.000000e+00 : f32
    %164 = vector.broadcast %cst_49 : f32 to vector<8x128xf32>
    %165 = arith.addf %163, %164 : vector<8x128xf32>
    %cst_50 = arith.constant 5.000000e-01 : f32
    %166 = vector.broadcast %cst_50 : f32 to vector<8x128xf32>
    %167 = arith.mulf %166, %165 : vector<8x128xf32>
    %c9_51 = arith.constant 9 : index
    %168 = memref.load %arg3[%c9_51] : memref<10xf32, #tpu.memory_space<smem>>
    %169 = vector.broadcast %168 : f32 to vector<8x128xf32>
    %170 = arith.mulf %167, %169 : vector<8x128xf32>
    %171 = arith.addf %154, %170 : vector<8x128xf32>
    %c0_52 = arith.constant 0 : index
    %172 = memref.load %arg4[%c0_52] : memref<1xf32, #tpu.memory_space<smem>>
    %173 = vector.broadcast %172 : f32 to vector<8x128xf32>
    %174 = arith.addf %171, %173 : vector<8x128xf32>
    %cst_53 = arith.constant 5.000000e-01 : f32
    %175 = vector.broadcast %cst_53 : f32 to vector<8x128xf32>
    %176 = arith.mulf %175, %174 : vector<8x128xf32>
    %177 = math.tanh %176 : vector<8x128xf32>
    %cst_54 = arith.constant 1.000000e+00 : f32
    %178 = vector.broadcast %cst_54 : f32 to vector<8x128xf32>
    %179 = arith.addf %177, %178 : vector<8x128xf32>
    %cst_55 = arith.constant 5.000000e-01 : f32
    %180 = vector.broadcast %cst_55 : f32 to vector<8x128xf32>
    %181 = arith.mulf %180, %179 : vector<8x128xf32>
    %c0_56 = arith.constant 0 : index
    %c0_57 = arith.constant 0 : index
    %182 = vector.load %arg6[%c0_56, %c0_57] : memref<8x128xf32, #tpu.memory_space<vmem>>, vector<8x128xf32>
    tpu.vector_store %arg6[%c0_56, %c0_57], %181 {strides = array<i32>} : memref<8x128xf32, #tpu.memory_space<vmem>>, vector<8x128xf32>,
    return
  }
  func.func @transform_0(%arg0: i32) -> i32 {
    %c0_i32 = arith.constant 0 : i32
    %c0_i32_0 = arith.constant 0 : i32
    return %c0_i32 : i32
  }
  func.func @transform_1(%arg0: i32) -> i32 {
    %c0_i32 = arith.constant 0 : i32
    %c0_i32_0 = arith.constant 0 : i32
    return %c0_i32 : i32
  }
  func.func @transform_2(%arg0: i32) -> i32 {
    %c0_i32 = arith.constant 0 : i32
    %c0_i32_0 = arith.constant 0 : i32
    return %c0_i32 : i32
  }
  func.func @transform_3(%arg0: i32) -> i32 {
    %c0_i32 = arith.constant 0 : i32
    %c0_i32_0 = arith.constant 0 : i32
    return %c0_i32 : i32
  }
  func.func @transform_4(%arg0: i32) -> (i32, i32) {
    %c0_i32 = arith.constant 0 : i32
    %c0_i32_0 = arith.constant 0 : i32
    return %arg0, %c0_i32 : i32, i32
  }
  func.func @transform_5(%arg0: i32) -> (i32, i32) {
    %c0_i32 = arith.constant 0 : i32
    %c0_i32_0 = arith.constant 0 : i32
    return %arg0, %c0_i32 : i32, i32
  }
}

</mosaic_0001>

<llo_original>
// kernel: tpu_custom_call.1
$region0: #{tpu_custom_call.1}
  #allocation0 [shape = 'u32[]', space=smem, size = 0x4, offset = 0x4, fixed_abs, tag = 'smem constant byte address 0x4 - core index']
  #allocation1 [shape = 'u32[144,128]{1,0:T(1,128)}', space=vmem, size = 0x12000, scoped, tag = 'internal scratch']
  #allocation2 [shape = 'f32[1]{0:T(128)S(6)}', space=smem, size = 0x200, scoped, tag = 'scoped memory for tpu_custom_call.1']
  %s0 = inlined_call_operand.vmem [shape: f32[10], index: 0, kind: input, shape index: {}]
  %s1 = inlined_call_operand.vmem [shape: f32[10], index: 1, kind: input, shape index: {}]
  %s2 = inlined_call_operand.vmem [shape: f32[10], index: 2, kind: input, shape index: {}]
  %s3 = inlined_call_operand.<no memory space> [shape: f32[1], index: 3, kind: input, shape index: {}]
  %s4 = inlined_call_operand.vmem [shape: f32[8,128], index: 4, kind: input, shape index: {}]
  %s5 = inlined_call_operand.hbm [shape: f32[8,128], index: 5, kind: output, shape index: {}]
  %s6 = sld [smem:[#allocation0]]
  $region42: #{tpu_custom_call.1} parent=0
    _
  %s8 = ssub.s32 1, %s6
  %s9 = scalar_select 0, %s8, %s6
  %10 = sst [smem:[#allocation2]] %s3
  $region1: #{tpu_custom_call.1} parent=0
    #allocation3 [shape = 'u8[512]{0}', space=smem, size = 0x200, scoped, tag = 'input window, operand 0, single buffered']
    #allocation4 [shape = 's32[1]{0}', space=sflag, size = 0x4, scoped, tag = 'scoped memory for tpu_custom_call.1']
    #allocation5 [shape = 's32[1]{0}', space=sflag, size = 0x4, scoped, tag = 'scoped memory for tpu_custom_call.1']
    #allocation6 [shape = 'u8[512]{0}', space=smem, size = 0x200, scoped, tag = 'input window, operand 1, single buffered']
    #allocation7 [shape = 's32[1]{0}', space=sflag, size = 0x4, scoped, tag = 'scoped memory for tpu_custom_call.1']
    #allocation8 [shape = 'u8[512]{0}', space=smem, size = 0x200, scoped, tag = 'input window, operand 2, single buffered']
    #allocation9 [shape = 'u8[4096]{0}', space=vmem, size = 0x1000, scoped, tag = 'output window, operand 0, single buffered']
    %11 = vsyncpa [#allocation5], 0
    %12 = vsyncpa [#allocation7], 0
    %13 = vsyncpa [#allocation4], 0
    // Predicated region
    $region2: #{tpu_custom_call.1} parent=1 // pred_check
      _
    $region3: #{tpu_custom_call.1} parent=1 // pred_check_branch
      %15 = sbr.rel (0) target = $region5
    $region4: #{tpu_custom_call.1} parent=1 // pred_region
      %s17 = ssub.s32 16, 16
      %18 = vsyncadd [#allocation5], %s17
      %s20 = sshll.u32 %s0, 4
      %s21 = int_to_ptr.vmem [resolvable:$true] %s20
      %23 = dma.vmem_to_smem %s21, 16, [#allocation3], [#allocation5]
    $region5: #{tpu_custom_call.1} parent=1 // pred_fallthru
      _
    // Predicated region
    $region6: #{tpu_custom_call.1} parent=1 // pred_check
      _
    $region7: #{tpu_custom_call.1} parent=1 // pred_check_branch
      %25 = sbr.rel (0) target = $region9
    $region8: #{tpu_custom_call.1} parent=1 // pred_region
      %s27 = ssub.s32 16, 16
      %28 = vsyncadd [#allocation7], %s27
      %s30 = sshll.u32 %s1, 4
      %s31 = int_to_ptr.vmem [resolvable:$true] %s30
      %33 = dma.vmem_to_smem %s31, 16, [#allocation6], [#allocation7]
    $region9: #{tpu_custom_call.1} parent=1 // pred_fallthru
      _
    // Predicated region
    $region10: #{tpu_custom_call.1} parent=1 // pred_check
      _
    $region11: #{tpu_custom_call.1} parent=1 // pred_check_branch
      %35 = sbr.rel (0) target = $region13
    $region12: #{tpu_custom_call.1} parent=1 // pred_region
      %s37 = ssub.s32 16, 16
      %38 = vsyncadd [#allocation7], %s37
      %s40 = sshll.u32 %s2, 4
      %s41 = int_to_ptr.vmem [resolvable:$true] %s40
      %43 = dma.vmem_to_smem %s41, 16, [#allocation8], [#allocation7]
    $region13: #{tpu_custom_call.1} parent=1 // pred_fallthru
      _
    // Predicated region
    $region14: #{tpu_custom_call.1} parent=1 // pred_check
      _
    $region15: #{tpu_custom_call.1} parent=1 // pred_check_branch
      %45 = sbr.rel (0) target = $region17
    $region16: #{tpu_custom_call.1} parent=1 // pred_region
      _
    $region17: #{tpu_custom_call.1} parent=1 // pred_fallthru
      _
    // Predicated region
    $region18: #{tpu_custom_call.1} parent=1 // pred_check
      _
    $region19: #{tpu_custom_call.1} parent=1 // pred_check_branch
      %47 = sbr.rel (0) target = $region21
    $region20: #{tpu_custom_call.1} parent=1 // pred_region
      _
    $region21: #{tpu_custom_call.1} parent=1 // pred_fallthru
      _
    // Predicated region
    $region22: #{tpu_custom_call.1} parent=1 // pred_check
      _
    $region23: #{tpu_custom_call.1} parent=1 // pred_check_branch
      %49 = sbr.rel (0) target = $region25
    $region24: #{tpu_custom_call.1} parent=1 // pred_region
      %50 = dma.done [#allocation5], 16
    $region25: #{tpu_custom_call.1} parent=1 // pred_fallthru
      _
    // Predicated region
    $region26: #{tpu_custom_call.1} parent=1 // pred_check
      _
    $region27: #{tpu_custom_call.1} parent=1 // pred_check_branch
      %52 = sbr.rel (0) target = $region29
    $region28: #{tpu_custom_call.1} parent=1 // pred_region
      %53 = dma.done [#allocation7], 16
    $region29: #{tpu_custom_call.1} parent=1 // pred_fallthru
      _
    // Predicated region
    $region30: #{tpu_custom_call.1} parent=1 // pred_check
      _
    $region31: #{tpu_custom_call.1} parent=1 // pred_check_branch
      %55 = sbr.rel (0) target = $region33
    $region32: #{tpu_custom_call.1} parent=1 // pred_region
      %56 = dma.done [#allocation7], 16
    $region33: #{tpu_custom_call.1} parent=1 // pred_fallthru
      _
    %57 = sfence
    %v58 = vld [vmem:[%s4] sm:$0xff]
    %s59 = sld [smem:[#allocation3]]
    %v60 = vstv %s59
    %v61 = vmul.f32 %v58, %v60
    %s62 = sld [smem:[#allocation6]]
    %v63 = vstv %s62
    %v64 = vadd.f32 %v61, %v63
    %v65 = vmul.f32 %v64, 0.5
    %v66 = vtanh.pop %v65
    %v67 = vadd.f32 %v66, 1.0
    %v68 = vmul.f32 %v67, 0.5
    %s69 = sld [smem:[#allocation8]]
    %v70 = vstv %s69
    %v71 = vmul.f32 %v68, %v70
    %v72 = vadd.f32 %v71, 0.0
    %s73 = sld [smem:[#allocation3 + $0x1]]
    %v74 = vstv %s73
    %v75 = vmul.f32 %v58, %v74
    %s76 = sld [smem:[#allocation6 + $0x1]]
    %v77 = vstv %s76
    %v78 = vadd.f32 %v75, %v77
    %v79 = vmul.f32 %v78, 0.5
    %v80 = vtanh.pop %v79
    %v81 = vadd.f32 %v80, 1.0
    %v82 = vmul.f32 %v81, 0.5
    %s83 = sld [smem:[#allocation8 + $0x1]]
    %v84 = vstv %s83
    %v85 = vmul.f32 %v82, %v84
    %v86 = vadd.f32 %v72, %v85
    %s87 = sld [smem:[#allocation3 + $0x2]]
    %v88 = vstv %s87
    %v89 = vmul.f32 %v58, %v88
    %s90 = sld [smem:[#allocation6 + $0x2]]
    %v91 = vstv %s90
    %v92 = vadd.f32 %v89, %v91
    %v93 = vmul.f32 %v92, 0.5
    %v94 = vtanh.pop %v93
    %v95 = vadd.f32 %v94, 1.0
    %v96 = vmul.f32 %v95, 0.5
    %s97 = sld [smem:[#allocation8 + $0x2]]
    %v98 = vstv %s97
    %v99 = vmul.f32 %v96, %v98
    %v100 = vadd.f32 %v86, %v99
    %s101 = sld [smem:[#allocation3 + $0x3]]
    %v102 = vstv %s101
    %v103 = vmul.f32 %v58, %v102
    %s104 = sld [smem:[#allocation6 + $0x3]]
    %v105 = vstv %s104
    %v106 = vadd.f32 %v103, %v105
    %v107 = vmul.f32 %v106, 0.5
    %v108 = vtanh.pop %v107
    %v109 = vadd.f32 %v108, 1.0
    %v110 = vmul.f32 %v109, 0.5
    %s111 = sld [smem:[#allocation8 + $0x3]]
    %v112 = vstv %s111
    %v113 = vmul.f32 %v110, %v112
    %v114 = vadd.f32 %v100, %v113
    %s115 = sld [smem:[#allocation3 + $0x4]]
    %v116 = vstv %s115
    %v117 = vmul.f32 %v58, %v116
    %s118 = sld [smem:[#allocation6 + $0x4]]
    %v119 = vstv %s118
    %v120 = vadd.f32 %v117, %v119
    %v121 = vmul.f32 %v120, 0.5
    %v122 = vtanh.pop %v121
    %v123 = vadd.f32 %v122, 1.0
    %v124 = vmul.f32 %v123, 0.5
    %s125 = sld [smem:[#allocation8 + $0x4]]
    %v126 = vstv %s125
    %v127 = vmul.f32 %v124, %v126
    %v128 = vadd.f32 %v114, %v127
    %s129 = sld [smem:[#allocation3 + $0x5]]
    %v130 = vstv %s129
    %v131 = vmul.f32 %v58, %v130
    %s132 = sld [smem:[#allocation6 + $0x5]]
    %v133 = vstv %s132
    %v134 = vadd.f32 %v131, %v133
    %v135 = vmul.f32 %v134, 0.5
    %v136 = vtanh.pop %v135
    %v137 = vadd.f32 %v136, 1.0
    %v138 = vmul.f32 %v137, 0.5
    %s139 = sld [smem:[#allocation8 + $0x5]]
    %v140 = vstv %s139
    %v141 = vmul.f32 %v138, %v140
    %v142 = vadd.f32 %v128, %v141
    %s143 = sld [smem:[#allocation3 + $0x6]]
    %v144 = vstv %s143
    %v145 = vmul.f32 %v58, %v144
    %s146 = sld [smem:[#allocation6 + $0x6]]
    %v147 = vstv %s146
    %v148 = vadd.f32 %v145, %v147
    %v149 = vmul.f32 %v148, 0.5
    %v150 = vtanh.pop %v149
    %v151 = vadd.f32 %v150, 1.0
    %v152 = vmul.f32 %v151, 0.5
    %s153 = sld [smem:[#allocation8 + $0x6]]
    %v154 = vstv %s153
    %v155 = vmul.f32 %v152, %v154
    %v156 = vadd.f32 %v142, %v155
    %s157 = sld [smem:[#allocation3 + $0x7]]
    %v158 = vstv %s157
    %v159 = vmul.f32 %v58, %v158
    %s160 = sld [smem:[#allocation6 + $0x7]]
    %v161 = vstv %s160
    %v162 = vadd.f32 %v159, %v161
    %v163 = vmul.f32 %v162, 0.5
    %v164 = vtanh.pop %v163
    %v165 = vadd.f32 %v164, 1.0
    %v166 = vmul.f32 %v165, 0.5
    %s167 = sld [smem:[#allocation8 + $0x7]]
    %v168 = vstv %s167
    %v169 = vmul.f32 %v166, %v168
    %v170 = vadd.f32 %v156, %v169
    %s171 = sld [smem:[#allocation3 + $0x8]]
    %v172 = vstv %s171
    %v173 = vmul.f32 %v58, %v172
    %s174 = sld [smem:[#allocation6 + $0x8]]
    %v175 = vstv %s174
    %v176 = vadd.f32 %v173, %v175
    %v177 = vmul.f32 %v176, 0.5
    %v178 = vtanh.pop %v177
    %v179 = vadd.f32 %v178, 1.0
    %v180 = vmul.f32 %v179, 0.5
    %s181 = sld [smem:[#allocation8 + $0x8]]
    %v182 = vstv %s181
    %v183 = vmul.f32 %v180, %v182
    %v184 = vadd.f32 %v170, %v183
    %s185 = sld [smem:[#allocation3 + $0x9]]
    %v186 = vstv %s185
    %v187 = vmul.f32 %v58, %v186
    %s188 = sld [smem:[#allocation6 + $0x9]]
    %v189 = vstv %s188
    %v190 = vadd.f32 %v187, %v189
    %v191 = vmul.f32 %v190, 0.5
    %v192 = vtanh.pop %v191
    %v193 = vadd.f32 %v192, 1.0
    %v194 = vmul.f32 %v193, 0.5
    %s195 = sld [smem:[#allocation8 + $0x9]]
    %v196 = vstv %s195
    %v197 = vmul.f32 %v194, %v196
    %v198 = vadd.f32 %v184, %v197
    %s199 = sld [smem:[#allocation2]]
    %v200 = vstv %s199
    %v201 = vadd.f32 %v198, %v200
    %v202 = vmul.f32 %v201, 0.5
    %v203 = vtanh.pop %v202
    %v204 = vadd.f32 %v203, 1.0
    %v205 = vmul.f32 %v204, 0.5
    %206 = vst [vmem:[#allocation9] sm:$0xff] %v205
    // Predicated region
    $region34: #{tpu_custom_call.1} parent=1 // pred_check
      _
    $region35: #{tpu_custom_call.1} parent=1 // pred_check_branch
      %208 = sbr.rel (0) target = $region37
    $region36: #{tpu_custom_call.1} parent=1 // pred_region
      %s210 = ssub.s32 128, 128
      %211 = vsyncadd [#allocation4], %s210
      %s213 = sshll.u32 [#allocation9], 4
      %s214 = int_to_ptr.vmem [resolvable:$true] %s213
      %216 = dma.vmem_to_hbm [thread:$0]  %s214, 128, %s5, [#allocation4]
    $region37: #{tpu_custom_call.1} parent=1 // pred_fallthru
      _
    // Predicated region
    $region38: #{tpu_custom_call.1} parent=1 // pred_check
      _
    $region39: #{tpu_custom_call.1} parent=1 // pred_check_branch
      %218 = sbr.rel (0) target = $region41
    $region40: #{tpu_custom_call.1} parent=1 // pred_region
      %219 = dma.done [#allocation4], 128
    $region41: #{tpu_custom_call.1} parent=1 // pred_fallthru
      _
    %220 = vsyncpa [#allocation4], 1
    %221 = vsyncpa [#allocation5], 1
    %222 = vsyncpa [#allocation7], 1

</llo_original>
